<compile_context>
chip_gen: v5e
topology: v5e:2x2
jax: 0.10.0
libtpu: 0.0.40
codegen_flags: <defaults>
</compile_context>

<pallas_src>
import jax
import jax.numpy as jnp
from jax.experimental import pallas as pl
from jax.experimental.pallas import tpu as pltpu

EPS = 1e-5
HIDDENS = (256, 128)


def _round_up(x, m):
    return (x + m - 1) // m * m


def decoder_kernel(x_ref,
                   w1_ref, b1_ref,
                   w2_ref, b2_ref,
                   w3_ref, b3_ref, s3_ref, t3_ref,
                   o_ref):
    """Fused 3-layer MLP (eval mode): bf16 MXU matmuls, f32 accumulate/VPU."""
    # x arrives already in bf16 (cast in the wrapper -> half the input DMA).
    h = jnp.dot(x_ref[...], w1_ref[...],
                preferred_element_type=jnp.float32) + b1_ref[...]
    h = jnp.maximum(h, 0.0)                     # layer1 (BN1 folded into w2/b2)

    h = jnp.dot(h.astype(jnp.bfloat16), w2_ref[...],
                preferred_element_type=jnp.float32) + b2_ref[...]
    h = jnp.maximum(h, 0.0)                     # layer2 (BN2 folded into w3/b3)

    h = jnp.dot(h.astype(jnp.bfloat16), w3_ref[...],
                preferred_element_type=jnp.float32) + b3_ref[...]
    h = jnp.maximum(h, 0.0)                     # layer3
    h = h * s3_ref[...] + t3_ref[...]           # BN3 affine (running stats)

    o_ref[...] = h.astype(o_ref.dtype)


def make_decoder_params(key, repr_size, in_size, window_size):
    """Raw PyTorch-style parameters (f32).  Weights pre-transposed [in, out]."""
    out_size = in_size * window_size
    dims = [(repr_size, HIDDENS[0]), (HIDDENS[0], HIDDENS[1]), (HIDDENS[1], out_size)]
    layers = []
    for din, dout in dims:
        key, kw, kb, kg, kbe, km, kv = jax.random.split(key, 7)
        layers.append(dict(
            w=0.02 * jax.random.normal(kw, (din, dout), jnp.float32),
            b=0.01 * jax.random.normal(kb, (1, dout), jnp.float32),
            gamma=1.0 + 0.1 * jax.random.normal(kg, (1, dout), jnp.float32),
            beta=0.1 * jax.random.normal(kbe, (1, dout), jnp.float32),
            mean=0.1 * jax.random.normal(km, (1, dout), jnp.float32),
            var=1.0 + 0.1 * jax.random.uniform(kv, (1, dout), jnp.float32),
        ))
    return layers


def _bn_affine(layer):
    scale = layer["gamma"] / jnp.sqrt(layer["var"] + EPS)
    shift = layer["beta"] - layer["mean"] * scale
    return scale, shift


def prepare_decoder_params(layers, weight_dtype=jnp.bfloat16):
    """Fold BN affines; fold BN1/BN2 into the next Linear; cast weights to bf16.

    No K/N padding: feature axes keep their exact sizes and the BlockSpecs use
    full-dim blocks, so no wasted HBM bytes / MXU columns."""
    l1, l2, l3 = layers
    s1, t1 = _bn_affine(l1)
    s2, t2 = _bn_affine(l2)
    s3, t3 = _bn_affine(l3)

    w1, b1 = l1["w"], l1["b"]
    # ReLU(.)*s1 + t1 feeding W2  ==  ReLU(.) @ (s1^T * W2) + (t1 @ W2 + b2)
    w2 = s1.reshape(-1, 1) * l2["w"]
    b2 = t1 @ l2["w"] + l2["b"]
    w3 = s2.reshape(-1, 1) * l3["w"]
    b3 = t2 @ l3["w"] + l3["b"]

    return (w1.astype(weight_dtype), b1.astype(jnp.float32),
            w2.astype(weight_dtype), b2.astype(jnp.float32),
            w3.astype(weight_dtype), b3.astype(jnp.float32),
            s3.astype(jnp.float32), t3.astype(jnp.float32))


def _choose_batch_tile(batch, batch_tile):
    """Balanced batch tiling: avoid a near-empty padded last tile, and give
    v7x's two TensorCores >=2 grid steps once the batch is large enough."""
    n_tiles = max(1, -(-batch // batch_tile))          # ceil div
    if n_tiles < 2 and batch >= 1024:
        n_tiles = 2
    return _round_up(-(-batch // n_tiles), 8)


def decoder_forward(x, prepared, in_size, window_size, *,
                    batch_tile=2048, out_dtype=jnp.bfloat16):
    """x: [batch, repr_size] -> [batch, window_size, in_size] (eval mode)."""
    w1, b1, w2, b2, w3, b3, s3, t3 = prepared
    batch, repr_size = x.shape
    k_in = w1.shape[0]
    n_out = w3.shape[1]
    assert k_in == repr_size
    assert n_out == in_size * window_size

    tb = _choose_batch_tile(batch, batch_tile)
    b_pad = _round_up(batch, tb)
    grid = (b_pad // tb,)

    # bf16 input: the kernel needs bf16 MXU operands anyway; cast before DMA.
    x_p = x.astype(jnp.bfloat16)
    if b_pad != batch:
        x_p = jnp.pad(x_p, ((0, b_pad - batch), (0, 0)))

    def resident(arr):
        # Same block index every grid step -> Pallas keeps it VMEM-resident.
        return pl.BlockSpec(arr.shape, lambda i: (0, 0))

    in_specs = [pl.BlockSpec((tb, k_in), lambda i: (i, 0))] + \
               [resident(a) for a in prepared]
    out_spec = pl.BlockSpec((tb, n_out), lambda i: (i, 0))

    out_itemsize = jnp.dtype(out_dtype).itemsize
    mac = k_in * HIDDENS[0] + HIDDENS[0] * HIDDENS[1] + HIDDENS[1] * n_out
    w_bytes = 2 * mac                                     # bf16 weights
    aff_bytes = 4 * (HIDDENS[0] + HIDDENS[1] + 3 * n_out)  # f32 biases/affine
    cost = pl.CostEstimate(
        flops=2 * b_pad * mac,
        transcendentals=0,
        bytes_accessed=b_pad * k_in * 2 + b_pad * n_out * out_itemsize
                       + w_bytes + aff_bytes)

    # Scoped-VMEM budget: double-buffered x/out blocks + weights + f32/bf16
    # intermediates.  Matters on v5e (16 MiB scoped default) / v7x (64 MiB phys).
    vmem_est = (2 * (w_bytes + aff_bytes)
                + 2 * tb * k_in * 2
                + 2 * tb * n_out * out_itemsize
                + tb * (HIDDENS[0] + HIDDENS[1]) * (4 + 2)
                + tb * max(n_out, 128) * 4)
    vmem_limit = int(min(64 * 1024 * 1024, max(32 * 1024 * 1024, 2 * vmem_est)))

    out = pl.pallas_call(
        decoder_kernel,
        out_shape=jax.ShapeDtypeStruct((b_pad, n_out), out_dtype),
        grid=grid,
        in_specs=in_specs,
        out_specs=out_spec,
        compiler_params=pltpu.CompilerParams(
            dimension_semantics=("parallel",),
            vmem_limit_bytes=vmem_limit),
        cost_estimate=cost,
    )(x_p, *prepared)

    if b_pad != batch:
        out = out[:batch]
    return out.reshape(batch, window_size, in_size)


if __name__ == "__main__":
    # Small shapes consistent with the module's forward.
    batch = 2
    repr_size = 32
    in_size = 4
    window_size = 8

    key = jax.random.PRNGKey(0)
    key, kx, kp = jax.random.split(key, 3)
    x = jax.random.normal(kx, (batch, repr_size), jnp.float32)

    layers = make_decoder_params(kp, repr_size, in_size, window_size)
    prepared = prepare_decoder_params(layers)

    y = decoder_forward(x, prepared, in_size, window_size)
    y = jax.block_until_ready(y)

    # Pure-JAX f32 eval-mode reference (Dropout identity, BN running stats).
    h = x
    for l in layers:
        scale = l["gamma"] / jnp.sqrt(l["var"] + EPS)
        shift = l["beta"] - l["mean"] * scale
        h = jnp.maximum(h @ l["w"] + l["b"], 0.0) * scale + shift
    ref = h.reshape(batch, window_size, in_size)

    assert y.shape == (batch, window_size, in_size)
    # Kernel uses bf16 MXU operands and bf16 output; compare loosely vs f32 ref.
    err = float(jnp.max(jnp.abs(y.astype(jnp.float32) - ref)))
    assert jnp.allclose(y.astype(jnp.float32), ref, atol=3e-2, rtol=3e-2), err

    print("KERNEL_OK")
</pallas_src>

<mosaic_0001>
module attributes {stable_mosaic.version = 11 : i64} {
  func.func @decoder_kernel(%arg0: i32, %arg1: memref<8x32xbf16, #tpu.memory_space<vmem>>, %arg2: memref<32x256xbf16, #tpu.memory_space<vmem>>, %arg3: memref<1x256xf32, #tpu.memory_space<vmem>>, %arg4: memref<256x128xbf16, #tpu.memory_space<vmem>>, %arg5: memref<1x128xf32, #tpu.memory_space<vmem>>, %arg6: memref<128x32xbf16, #tpu.memory_space<vmem>>, %arg7: memref<1x32xf32, #tpu.memory_space<vmem>>, %arg8: memref<1x32xf32, #tpu.memory_space<vmem>>, %arg9: memref<1x32xf32, #tpu.memory_space<vmem>>, %arg10: memref<8x32xbf16, #tpu.memory_space<vmem>>) attributes {dimension_semantics = [#tpu.dimension_semantics<parallel>], iteration_bounds = array<i64: 1>, scalar_prefetch = 0 : i64, scratch_operands = 0 : i64, tpu.core_type = #tpu.core_type<tc>, window_params = [{transform_indices = @transform_0, window_bounds = array<i64: 8, 32>}, {pipeline_mode = #tpu.pipeline_mode<synchronous>, transform_indices = @transform_1, window_bounds = array<i64: 32, 256>}, {pipeline_mode = #tpu.pipeline_mode<synchronous>, transform_indices = @transform_2, window_bounds = array<i64: 1, 256>}, {pipeline_mode = #tpu.pipeline_mode<synchronous>, transform_indices = @transform_3, window_bounds = array<i64: 256, 128>}, {pipeline_mode = #tpu.pipeline_mode<synchronous>, transform_indices = @transform_4, window_bounds = array<i64: 1, 128>}, {pipeline_mode = #tpu.pipeline_mode<synchronous>, transform_indices = @transform_5, window_bounds = array<i64: 128, 32>}, {pipeline_mode = #tpu.pipeline_mode<synchronous>, transform_indices = @transform_6, window_bounds = array<i64: 1, 32>}, {pipeline_mode = #tpu.pipeline_mode<synchronous>, transform_indices = @transform_7, window_bounds = array<i64: 1, 32>}, {pipeline_mode = #tpu.pipeline_mode<synchronous>, transform_indices = @transform_8, window_bounds = array<i64: 1, 32>}, {transform_indices = @transform_9, window_bounds = array<i64: 8, 32>}]} {
    %c0 = arith.constant 0 : index
    %c0_0 = arith.constant 0 : index
    %0 = vector.load %arg1[%c0, %c0_0] : memref<8x32xbf16, #tpu.memory_space<vmem>>, vector<8x32xbf16>
    %c0_1 = arith.constant 0 : index
    %c0_2 = arith.constant 0 : index
    %1 = vector.load %arg2[%c0_1, %c0_2] : memref<32x256xbf16, #tpu.memory_space<vmem>>, vector<32x256xbf16>
    %cst = arith.constant dense<0.000000e+00> : vector<8x256xf32>
    %2 = tpu.matmul %0, %1, %cst {dimension_numbers = #tpu.dot_dimension_numbers<[1], [0], [0], [1], [0, 0, 1, 1], [], []>} : vector<8x32xbf16>, vector<32x256xbf16>, vector<8x256xf32> -> vector<8x256xf32>
    %c0_3 = arith.constant 0 : index
    %c0_4 = arith.constant 0 : index
    %3 = vector.load %arg3[%c0_3, %c0_4] : memref<1x256xf32, #tpu.memory_space<vmem>>, vector<1x256xf32>
    %4 = vector.broadcast %3 : vector<1x256xf32> to vector<8x256xf32>
    %5 = arith.addf %2, %4 : vector<8x256xf32>
    %cst_5 = arith.constant 0.000000e+00 : f32
    %6 = vector.broadcast %cst_5 : f32 to vector<8x256xf32>
    %7 = arith.maximumf %5, %6 : vector<8x256xf32>
    %8 = arith.truncf %7 : vector<8x256xf32> to vector<8x256xbf16>
    %c0_6 = arith.constant 0 : index
    %c0_7 = arith.constant 0 : index
    %9 = vector.load %arg4[%c0_6, %c0_7] : memref<256x128xbf16, #tpu.memory_space<vmem>>, vector<256x128xbf16>
    %cst_8 = arith.constant dense<0.000000e+00> : vector<8x128xf32>
    %10 = tpu.matmul %8, %9, %cst_8 {dimension_numbers = #tpu.dot_dimension_numbers<[1], [0], [0], [1], [0, 0, 1, 1], [], []>} : vector<8x256xbf16>, vector<256x128xbf16>, vector<8x128xf32> -> vector<8x128xf32>
    %c0_9 = arith.constant 0 : index
    %c0_10 = arith.constant 0 : index
    %11 = vector.load %arg5[%c0_9, %c0_10] : memref<1x128xf32, #tpu.memory_space<vmem>>, vector<1x128xf32>
    %12 = vector.broadcast %11 : vector<1x128xf32> to vector<8x128xf32>
    %13 = arith.addf %10, %12 : vector<8x128xf32>
    %cst_11 = arith.constant 0.000000e+00 : f32
    %14 = vector.broadcast %cst_11 : f32 to vector<8x128xf32>
    %15 = arith.maximumf %13, %14 : vector<8x128xf32>
    %16 = arith.truncf %15 : vector<8x128xf32> to vector<8x128xbf16>
    %c0_12 = arith.constant 0 : index
    %c0_13 = arith.constant 0 : index
    %17 = vector.load %arg6[%c0_12, %c0_13] : memref<128x32xbf16, #tpu.memory_space<vmem>>, vector<128x32xbf16>
    %cst_14 = arith.constant dense<0.000000e+00> : vector<8x32xf32>
    %18 = tpu.matmul %16, %17, %cst_14 {dimension_numbers = #tpu.dot_dimension_numbers<[1], [0], [0], [1], [0, 0, 1, 1], [], []>} : vector<8x128xbf16>, vector<128x32xbf16>, vector<8x32xf32> -> vector<8x32xf32>
    %c0_15 = arith.constant 0 : index
    %c0_16 = arith.constant 0 : index
    %19 = vector.load %arg7[%c0_15, %c0_16] : memref<1x32xf32, #tpu.memory_space<vmem>>, vector<1x32xf32>
    %20 = vector.broadcast %19 : vector<1x32xf32> to vector<8x32xf32>
    %21 = arith.addf %18, %20 : vector<8x32xf32>
    %cst_17 = arith.constant 0.000000e+00 : f32
    %22 = vector.broadcast %cst_17 : f32 to vector<8x32xf32>
    %23 = arith.maximumf %21, %22 : vector<8x32xf32>
    %c0_18 = arith.constant 0 : index
    %c0_19 = arith.constant 0 : index
    %24 = vector.load %arg8[%c0_18, %c0_19] : memref<1x32xf32, #tpu.memory_space<vmem>>, vector<1x32xf32>
    %25 = vector.broadcast %24 : vector<1x32xf32> to vector<8x32xf32>
    %26 = arith.mulf %23, %25 : vector<8x32xf32>
    %c0_20 = arith.constant 0 : index
    %c0_21 = arith.constant 0 : index
    %27 = vector.load %arg9[%c0_20, %c0_21] : memref<1x32xf32, #tpu.memory_space<vmem>>, vector<1x32xf32>
    %28 = vector.broadcast %27 : vector<1x32xf32> to vector<8x32xf32>
    %29 = arith.addf %26, %28 : vector<8x32xf32>
    %30 = arith.truncf %29 : vector<8x32xf32> to vector<8x32xbf16>
    %c0_22 = arith.constant 0 : index
    %c0_23 = arith.constant 0 : index
    %31 = vector.load %arg10[%c0_22, %c0_23] : memref<8x32xbf16, #tpu.memory_space<vmem>>, vector<8x32xbf16>
    tpu.vector_store %arg10[%c0_22, %c0_23], %30 {strides = array<i32>} : memref<8x32xbf16, #tpu.memory_space<vmem>>, vector<8x32xbf16>,
    return
  }
  func.func @transform_0(%arg0: i32) -> (i32, i32) {
    %c0_i32 = arith.constant 0 : i32
    %c0_i32_0 = arith.constant 0 : i32
    return %arg0, %c0_i32 : i32, i32
  }
  func.func @transform_1(%arg0: i32) -> (i32, i32) {
    %c0_i32 = arith.constant 0 : i32
    %c0_i32_0 = arith.constant 0 : i32
    %c0_i32_1 = arith.constant 0 : i32
    return %c0_i32, %c0_i32_0 : i32, i32
  }
  func.func @transform_2(%arg0: i32) -> (i32, i32) {
    %c0_i32 = arith.constant 0 : i32
    %c0_i32_0 = arith.constant 0 : i32
    %c0_i32_1 = arith.constant 0 : i32
    return %c0_i32, %c0_i32_0 : i32, i32
  }
  func.func @transform_3(%arg0: i32) -> (i32, i32) {
    %c0_i32 = arith.constant 0 : i32
    %c0_i32_0 = arith.constant 0 : i32
    %c0_i32_1 = arith.constant 0 : i32
    return %c0_i32, %c0_i32_0 : i32, i32
  }
  func.func @transform_4(%arg0: i32) -> (i32, i32) {
    %c0_i32 = arith.constant 0 : i32
    %c0_i32_0 = arith.constant 0 : i32
    %c0_i32_1 = arith.constant 0 : i32
    return %c0_i32, %c0_i32_0 : i32, i32
  }
  func.func @transform_5(%arg0: i32) -> (i32, i32) {
    %c0_i32 = arith.constant 0 : i32
    %c0_i32_0 = arith.constant 0 : i32
    %c0_i32_1 = arith.constant 0 : i32
    return %c0_i32, %c0_i32_0 : i32, i32
  }
  func.func @transform_6(%arg0: i32) -> (i32, i32) {
    %c0_i32 = arith.constant 0 : i32
    %c0_i32_0 = arith.constant 0 : i32
    %c0_i32_1 = arith.constant 0 : i32
    return %c0_i32, %c0_i32_0 : i32, i32
  }
  func.func @transform_7(%arg0: i32) -> (i32, i32) {
    %c0_i32 = arith.constant 0 : i32
    %c0_i32_0 = arith.constant 0 : i32
    %c0_i32_1 = arith.constant 0 : i32
    return %c0_i32, %c0_i32_0 : i32, i32
  }
  func.func @transform_8(%arg0: i32) -> (i32, i32) {
    %c0_i32 = arith.constant 0 : i32
    %c0_i32_0 = arith.constant 0 : i32
    %c0_i32_1 = arith.constant 0 : i32
    return %c0_i32, %c0_i32_0 : i32, i32
  }
  func.func @transform_9(%arg0: i32) -> (i32, i32) {
    %c0_i32 = arith.constant 0 : i32
    %c0_i32_0 = arith.constant 0 : i32
    return %arg0, %c0_i32 : i32, i32
  }
}

</mosaic_0001>

<llo_original>
// kernel: tpu_custom_call.1
$region0: #{tpu_custom_call.1}
  #allocation0 [shape = 'u32[]', space=smem, size = 0x4, offset = 0x4, fixed_abs, tag = 'smem constant byte address 0x4 - core index']
  #allocation1 [shape = 'u32[72,128]{1,0:T(1,128)}', space=vmem, size = 0x9000, scoped, tag = 'internal scratch']
  %s0 = inlined_call_operand.vmem [shape: bf16[8,32], index: 0, kind: input, shape index: {}]
  %s1 = inlined_call_operand.vmem [shape: bf16[32,256], index: 1, kind: input, shape index: {}]
  %s2 = inlined_call_operand.vmem [shape: f32[1,256], index: 2, kind: input, shape index: {}]
  %s3 = inlined_call_operand.hbm [shape: bf16[256,128], index: 3, kind: input, shape index: {}]
  %s4 = inlined_call_operand.vmem [shape: f32[1,128], index: 4, kind: input, shape index: {}]
  %s5 = inlined_call_operand.vmem [shape: bf16[128,32], index: 5, kind: input, shape index: {}]
  %s6 = inlined_call_operand.vmem [shape: f32[1,32], index: 6, kind: input, shape index: {}]
  %s7 = inlined_call_operand.vmem [shape: f32[1,32], index: 7, kind: input, shape index: {}]
  %s8 = inlined_call_operand.vmem [shape: f32[1,32], index: 8, kind: input, shape index: {}]
  %s9 = inlined_call_operand.hbm [shape: bf16[8,32], index: 9, kind: output, shape index: {}]
  %s10 = sld [smem:[#allocation0]]
  $region50: #{tpu_custom_call.1} parent=0
    _
  %s12 = ssub.s32 1, %s10
  %s13 = scalar_select 0, %s12, %s10
  $region1: #{tpu_custom_call.1} parent=0
    #allocation2 [shape = 'u8[65536]{0}', space=vmem, size = 0x10000, scoped, tag = 'input window, operand 3, single buffered']
    #allocation3 [shape = 's32[1]{0}', space=sflag, size = 0x4, scoped, tag = 'scoped memory for tpu_custom_call.1']
    #allocation4 [shape = 's32[1]{0}', space=sflag, size = 0x4, scoped, tag = 'scoped memory for tpu_custom_call.1']
    #allocation5 [shape = 'u8[2048]{0}', space=vmem, size = 0x800, scoped, tag = 'output window, operand 0, single buffered']
    %14 = vsyncpa [#allocation3], 0
    %15 = vsyncpa [#allocation4], 0
    // Predicated region
    $region2: #{tpu_custom_call.1} parent=1 // pred_check
      _
    $region3: #{tpu_custom_call.1} parent=1 // pred_check_branch
      %17 = sbr.rel (0) target = $region5
    $region4: #{tpu_custom_call.1} parent=1 // pred_region
      _
    $region5: #{tpu_custom_call.1} parent=1 // pred_fallthru
      _
    // Predicated region
    $region6: #{tpu_custom_call.1} parent=1 // pred_check
      _
    $region7: #{tpu_custom_call.1} parent=1 // pred_check_branch
      %19 = sbr.rel (0) target = $region9
    $region8: #{tpu_custom_call.1} parent=1 // pred_region
      _
    $region9: #{tpu_custom_call.1} parent=1 // pred_fallthru
      _
    // Predicated region
    $region10: #{tpu_custom_call.1} parent=1 // pred_check
      _
    $region11: #{tpu_custom_call.1} parent=1 // pred_check_branch
      %21 = sbr.rel (0) target = $region13
    $region12: #{tpu_custom_call.1} parent=1 // pred_region
      _
    $region13: #{tpu_custom_call.1} parent=1 // pred_fallthru
      _
    // Predicated region
    $region14: #{tpu_custom_call.1} parent=1 // pred_check
      _
    $region15: #{tpu_custom_call.1} parent=1 // pred_check_branch
      %23 = sbr.rel (0) target = $region17
    $region16: #{tpu_custom_call.1} parent=1 // pred_region
      %25 = vsyncadd [#allocation3], 0
      %s26 = sshll.u32 %s3, 4
      %s27 = int_to_ptr.hbm [resolvable:$true] %s26
      %s28 = sshll.u32 [#allocation2], 4
      %s29 = int_to_ptr.vmem [resolvable:$true] %s28
      %34 = dma.hbm_to_vmem [thread:$0]  %s27, 2048, %s29, [#allocation3], 64, 64, 4
    $region17: #{tpu_custom_call.1} parent=1 // pred_fallthru
      _
    // Predicated region
    $region18: #{tpu_custom_call.1} parent=1 // pred_check
      _
    $region19: #{tpu_custom_call.1} parent=1 // pred_check_branch
      %36 = sbr.rel (0) target = $region21
    $region20: #{tpu_custom_call.1} parent=1 // pred_region
      _
    $region21: #{tpu_custom_call.1} parent=1 // pred_fallthru
      _
    // Predicated region
    $region22: #{tpu_custom_call.1} parent=1 // pred_check
      _
    $region23: #{tpu_custom_call.1} parent=1 // pred_check_branch
      %38 = sbr.rel (0) target = $region25
    $region24: #{tpu_custom_call.1} parent=1 // pred_region
      _
    $region25: #{tpu_custom_call.1} parent=1 // pred_fallthru
      _
    // Predicated region
    $region26: #{tpu_custom_call.1} parent=1 // pred_check
      _
    $region27: #{tpu_custom_call.1} parent=1 // pred_check_branch
      %40 = sbr.rel (0) target = $region29
    $region28: #{tpu_custom_call.1} parent=1 // pred_region
      _
    $region29: #{tpu_custom_call.1} parent=1 // pred_fallthru
      _
    // Predicated region
    $region30: #{tpu_custom_call.1} parent=1 // pred_check
      _
    $region31: #{tpu_custom_call.1} parent=1 // pred_check_branch
      %42 = sbr.rel (0) target = $region33
    $region32: #{tpu_custom_call.1} parent=1 // pred_region
      _
    $region33: #{tpu_custom_call.1} parent=1 // pred_fallthru
      _
    // Predicated region
    $region34: #{tpu_custom_call.1} parent=1 // pred_check
      _
    $region35: #{tpu_custom_call.1} parent=1 // pred_check_branch
      %44 = sbr.rel (0) target = $region37
    $region36: #{tpu_custom_call.1} parent=1 // pred_region
      _
    $region37: #{tpu_custom_call.1} parent=1 // pred_fallthru
      _
    // Predicated region
    $region38: #{tpu_custom_call.1} parent=1 // pred_check
      _
    $region39: #{tpu_custom_call.1} parent=1 // pred_check_branch
      %46 = sbr.rel (0) target = $region41
    $region40: #{tpu_custom_call.1} parent=1 // pred_region
      %48 = dma.done [#allocation3], 2048
    $region41: #{tpu_custom_call.1} parent=1 // pred_fallthru
      _
    %v50 = vld [vmem:[%s0] sm:$0xf]
    %v51 = vld [vmem:[%s1] sm:$0xff]
    %v52 = vld [vmem:[%s1 + $0x8] sm:$0xff]
    %v53 = vld [vmem:[%s1 + $0x10] sm:$0xff]
    %v54 = vld [vmem:[%s1 + $0x18] sm:$0xff]
    %v55 = vld [vmem:[%s2] sm:$0x3]
    %v57 = vperm.slane %v55, 0
    %v58 = vperm.slane %v55, 1
    %v65 = vunpack.c.l.b16 %v51
    %v66 = vunpack.c.h.b16 %v51
    %v67 = vunpack.c.l.b16 %v52
    %v68 = vunpack.c.h.b16 %v52
    %v69 = vunpack.c.l.b16 %v53
    %v70 = vunpack.c.h.b16 %v53
    %v71 = vunpack.c.l.b16 %v54
    %v72 = vunpack.c.h.b16 %v54
    %v73 = vpack.c.b16 %v67, %v65
    %v74 = vpack.c.b16 %v68, %v66
    %v75 = vpack.c.b16 %v71, %v69
    %v76 = vpack.c.b16 %v72, %v70
    %vm81 = vcmask 261120
    %v83 = vsel %vm81, %v50, 0
    %85 = vmatpush.bf16.msra.mxu0 0
    %86 = vmatpush.bf16.msra.mxu0 0
    %87 = vmatpush.bf16.msra.mxu0 0
    %88 = vmatpush.bf16.msra.mxu0 0
    %89 = vmatpush.bf16.msra.mxu0 0
    %90 = vmatpush.bf16.msra.mxu0 0
    %91 = vmatpush.bf16.msra.mxu0 %v75
    %92 = vmatpush.bf16.msra.mxu0 %v73
    %93 = vmatmul.bf16.gmra.mxu0 %v83
    %v94 = vpop.f32.mrf.mxu0
    %v95 = vadd.f32 %v57, %v94
    %v96 = vpop.f32.mrf.mxu0
    %97 = vdwg.mxu0
    %98 = vmatpush.bf16.msra.mxu0 0
    %99 = vmatpush.bf16.msra.mxu0 0
    %100 = vmatpush.bf16.msra.mxu0 0
    %101 = vmatpush.bf16.msra.mxu0 0
    %102 = vmatpush.bf16.msra.mxu0 0
    %103 = vmatpush.bf16.msra.mxu0 0
    %104 = vmatpush.bf16.msra.mxu0 %v76
    %105 = vmatpush.bf16.msra.mxu0 %v74
    %106 = vmatmul.bf16.gmra.mxu0 %v83
    %v107 = vpop.f32.mrf.mxu0
    %v108 = vadd.f32 %v58, %v107
    %v109 = vpop.f32.mrf.mxu0
    %110 = vdwg.mxu0
    %v111 = vmax.f32 %v95, 0.0
    %v112 = vmax.f32 %v108, 0.0
    %v113 = vpack.c.bf16 %v111, %v111
    %v114 = vpack.c.bf16 %v112, %v112
    %v115 = vld [vmem:[#allocation2] sm:$0xf]
    %v116 = vld [vmem:[#allocation2 + $0x4] sm:$0xf]
    %v117 = vld [vmem:[#allocation2 + $0x8] sm:$0xf]
    %v118 = vld [vmem:[#allocation2 + $0xc] sm:$0xf]
    %v119 = vld [vmem:[#allocation2 + $0x10] sm:$0xf]
    %v120 = vld [vmem:[#allocation2 + $0x14] sm:$0xf]
    %v121 = vld [vmem:[#allocation2 + $0x18] sm:$0xf]
    %v122 = vld [vmem:[#allocation2 + $0x1c] sm:$0xf]
    %v123 = vld [vmem:[#allocation2 + $0x20] sm:$0xf]
    %v124 = vld [vmem:[#allocation2 + $0x24] sm:$0xf]
    %v125 = vld [vmem:[#allocation2 + $0x28] sm:$0xf]
    %v126 = vld [vmem:[#allocation2 + $0x2c] sm:$0xf]
    %v127 = vld [vmem:[#allocation2 + $0x30] sm:$0xf]
    %v128 = vld [vmem:[#allocation2 + $0x34] sm:$0xf]
    %v129 = vld [vmem:[#allocation2 + $0x38] sm:$0xf]
    %v130 = vld [vmem:[#allocation2 + $0x3c] sm:$0xf]
    %v131 = vld [vmem:[#allocation2 + $0x40] sm:$0xf]
    %v132 = vld [vmem:[#allocation2 + $0x44] sm:$0xf]
    %v133 = vld [vmem:[#allocation2 + $0x48] sm:$0xf]
    %v134 = vld [vmem:[#allocation2 + $0x4c] sm:$0xf]
    %v135 = vld [vmem:[#allocation2 + $0x50] sm:$0xf]
    %v136 = vld [vmem:[#allocation2 + $0x54] sm:$0xf]
    %v137 = vld [vmem:[#allocation2 + $0x58] sm:$0xf]
    %v138 = vld [vmem:[#allocation2 + $0x5c] sm:$0xf]
    %v139 = vld [vmem:[#allocation2 + $0x60] sm:$0xf]
    %v140 = vld [vmem:[#allocation2 + $0x64] sm:$0xf]
    %v141 = vld [vmem:[#allocation2 + $0x68] sm:$0xf]
    %v142 = vld [vmem:[#allocation2 + $0x6c] sm:$0xf]
    %v143 = vld [vmem:[#allocation2 + $0x70] sm:$0xf]
    %v144 = vld [vmem:[#allocation2 + $0x74] sm:$0xf]
    %v145 = vld [vmem:[#allocation2 + $0x78] sm:$0xf]
    %v146 = vld [vmem:[#allocation2 + $0x7c] sm:$0xf]
    %v147 = vld [vmem:[%s4] sm:$0x1]
    %v149 = vperm.slane %v147, 0
    %v183 = vunpack.c.l.b16 %v115
    %v184 = vunpack.c.l.b16 %v116
    %v185 = vunpack.c.l.b16 %v117
    %v186 = vunpack.c.l.b16 %v118
    %v187 = vunpack.c.l.b16 %v119
    %v188 = vunpack.c.l.b16 %v120
    %v189 = vunpack.c.l.b16 %v121
    %v190 = vunpack.c.l.b16 %v122
    %v191 = vunpack.c.l.b16 %v123
    %v192 = vunpack.c.l.b16 %v124
    %v193 = vunpack.c.l.b16 %v125
    %v194 = vunpack.c.l.b16 %v126
    %v195 = vunpack.c.l.b16 %v127
    %v196 = vunpack.c.l.b16 %v128
    %v197 = vunpack.c.l.b16 %v129
    %v198 = vunpack.c.l.b16 %v130
    %v199 = vunpack.c.l.b16 %v131
    %v200 = vunpack.c.l.b16 %v132
    %v201 = vunpack.c.l.b16 %v133
    %v202 = vunpack.c.l.b16 %v134
    %v203 = vunpack.c.l.b16 %v135
    %v204 = vunpack.c.l.b16 %v136
    %v205 = vunpack.c.l.b16 %v137
    %v206 = vunpack.c.l.b16 %v138
    %v207 = vunpack.c.l.b16 %v139
    %v208 = vunpack.c.l.b16 %v140
    %v209 = vunpack.c.l.b16 %v141
    %v210 = vunpack.c.l.b16 %v142
    %v211 = vunpack.c.l.b16 %v143
    %v212 = vunpack.c.l.b16 %v144
    %v213 = vunpack.c.l.b16 %v145
    %v214 = vunpack.c.l.b16 %v146
    %v215 = vpack.c.b16 %v184, %v183
    %v216 = vpack.c.b16 %v186, %v185
    %v217 = vpack.c.b16 %v188, %v187
    %v218 = vpack.c.b16 %v190, %v189
    %v219 = vpack.c.b16 %v192, %v191
    %v220 = vpack.c.b16 %v194, %v193
    %v221 = vpack.c.b16 %v196, %v195
    %v222 = vpack.c.b16 %v198, %v197
    %v223 = vpack.c.b16 %v200, %v199
    %v224 = vpack.c.b16 %v202, %v201
    %v225 = vpack.c.b16 %v204, %v203
    %v226 = vpack.c.b16 %v206, %v205
    %v227 = vpack.c.b16 %v208, %v207
    %v228 = vpack.c.b16 %v210, %v209
    %v229 = vpack.c.b16 %v212, %v211
    %v230 = vpack.c.b16 %v214, %v213
    %247 = vmatpush.bf16.msra.mxu0 %v222
    %248 = vmatpush.bf16.msra.mxu0 %v221
    %249 = vmatpush.bf16.msra.mxu0 %v220
    %250 = vmatpush.bf16.msra.mxu0 %v219
    %251 = vmatpush.bf16.msra.mxu0 %v218
    %252 = vmatpush.bf16.msra.mxu0 %v217
    %253 = vmatpush.bf16.msra.mxu0 %v216
    %254 = vmatpush.bf16.msra.mxu0 %v215
    %255 = vmatmul.bf16.gmra.mxu0 %v113
    %v256 = vpop.f32.mrf.mxu0
    %v257 = vadd.f32 %v149, %v256
    %v258 = vpop.f32.mrf.mxu0
    %259 = vdwg.mxu0
    %260 = vmatpush.bf16.msra.mxu0 %v230
    %261 = vmatpush.bf16.msra.mxu0 %v229
    %262 = vmatpush.bf16.msra.mxu0 %v228
    %263 = vmatpush.bf16.msra.mxu0 %v227
    %264 = vmatpush.bf16.msra.mxu0 %v226
    %265 = vmatpush.bf16.msra.mxu0 %v225
    %266 = vmatpush.bf16.msra.mxu0 %v224
    %267 = vmatpush.bf16.msra.mxu0 %v223
    %268 = vmatmul.bf16.gmra.mxu0 %v114
    %v269 = vpop.f32.mrf.mxu0
    %v270 = vadd.f32 %v257, %v269
    %v271 = vpop.f32.mrf.mxu0
    %272 = vdwg.mxu0
    %v273 = vmax.f32 %v270, 0.0
    %v274 = vpack.c.bf16 %v273, %v273
    %v275 = vld [vmem:[%s5] sm:$0xf]
    %v276 = vld [vmem:[%s5 + $0x4] sm:$0xf]
    %v277 = vld [vmem:[%s5 + $0x8] sm:$0xf]
    %v278 = vld [vmem:[%s5 + $0xc] sm:$0xf]
    %v279 = vld [vmem:[%s5 + $0x10] sm:$0xf]
    %v280 = vld [vmem:[%s5 + $0x14] sm:$0xf]
    %v281 = vld [vmem:[%s5 + $0x18] sm:$0xf]
    %v282 = vld [vmem:[%s5 + $0x1c] sm:$0xf]
    %v283 = vld [vmem:[%s5 + $0x20] sm:$0xf]
    %v284 = vld [vmem:[%s5 + $0x24] sm:$0xf]
    %v285 = vld [vmem:[%s5 + $0x28] sm:$0xf]
    %v286 = vld [vmem:[%s5 + $0x2c] sm:$0xf]
    %v287 = vld [vmem:[%s5 + $0x30] sm:$0xf]
    %v288 = vld [vmem:[%s5 + $0x34] sm:$0xf]
    %v289 = vld [vmem:[%s5 + $0x38] sm:$0xf]
    %v290 = vld [vmem:[%s5 + $0x3c] sm:$0xf]
    %v291 = vld [vmem:[%s6] sm:$0x1]
    %v293 = vperm.slane %v291, 0
    %v311 = vunpack.c.l.b16 %v275
    %v312 = vunpack.c.l.b16 %v276
    %v313 = vunpack.c.l.b16 %v277
    %v314 = vunpack.c.l.b16 %v278
    %v315 = vunpack.c.l.b16 %v279
    %v316 = vunpack.c.l.b16 %v280
    %v317 = vunpack.c.l.b16 %v281
    %v318 = vunpack.c.l.b16 %v282
    %v319 = vunpack.c.l.b16 %v283
    %v320 = vunpack.c.l.b16 %v284
    %v321 = vunpack.c.l.b16 %v285
    %v322 = vunpack.c.l.b16 %v286
    %v323 = vunpack.c.l.b16 %v287
    %v324 = vunpack.c.l.b16 %v288
    %v325 = vunpack.c.l.b16 %v289
    %v326 = vunpack.c.l.b16 %v290
    %v327 = vpack.c.b16 %v312, %v311
    %v328 = vpack.c.b16 %v314, %v313
    %v329 = vpack.c.b16 %v316, %v315
    %v330 = vpack.c.b16 %v318, %v317
    %v331 = vpack.c.b16 %v320, %v319
    %v332 = vpack.c.b16 %v322, %v321
    %v333 = vpack.c.b16 %v324, %v323
    %v334 = vpack.c.b16 %v326, %v325
    %343 = vmatpush.bf16.msra.mxu0 %v334
    %344 = vmatpush.bf16.msra.mxu0 %v333
    %345 = vmatpush.bf16.msra.mxu0 %v332
    %346 = vmatpush.bf16.msra.mxu0 %v331
    %347 = vmatpush.bf16.msra.mxu0 %v330
    %348 = vmatpush.bf16.msra.mxu0 %v329
    %349 = vmatpush.bf16.msra.mxu0 %v328
    %350 = vmatpush.bf16.msra.mxu0 %v327
    %351 = vmatmul.bf16.gmra.mxu0 %v274
    %v352 = vpop.f32.mrf.mxu0
    %v353 = vadd.f32 %v293, %v352
    %v354 = vpop.f32.mrf.mxu0
    %355 = vdwg.mxu0
    %v356 = vmax.f32 %v353, 0.0
    %v357 = vld [vmem:[%s7] sm:$0x1]
    %v359 = vperm.slane %v357, 0
    %v361 = vmul.f32 %v356, %v359
    %v362 = vld [vmem:[%s8] sm:$0x1]
    %v364 = vperm.slane %v362, 0
    %v366 = vadd.f32 %v361, %v364
    %v367 = vpack.c.bf16 %v366, %v366
    %vm368 = vcmask 257024
    %369 = vst.msk [vmem:[#allocation5] sm:$0xf] %vm368, %v367
    // Predicated region
    $region42: #{tpu_custom_call.1} parent=1 // pred_check
      _
    $region43: #{tpu_custom_call.1} parent=1 // pred_check_branch
      %371 = sbr.rel (0) target = $region45
    $region44: #{tpu_custom_call.1} parent=1 // pred_region
      %373 = vsyncadd [#allocation4], 0
      %s375 = sshll.u32 [#allocation5], 4
      %s376 = int_to_ptr.vmem [resolvable:$true] %s375
      %s377 = sshll.u32 %s9, 4
      %s378 = int_to_ptr.hbm [resolvable:$true] %s377
      %380 = dma.vmem_to_hbm [thread:$0]  %s376, 64, %s378, [#allocation4]
    $region45: #{tpu_custom_call.1} parent=1 // pred_fallthru
      _
    // Predicated region
    $region46: #{tpu_custom_call.1} parent=1 // pred_check
      _
    $region47: #{tpu_custom_call.1} parent=1 // pred_check_branch
      %382 = sbr.rel (0) target = $region49
    $region48: #{tpu_custom_call.1} parent=1 // pred_region
      %384 = dma.done [#allocation4], 64
    $region49: #{tpu_custom_call.1} parent=1 // pred_fallthru
      _
    %385 = vsyncpa [#allocation3], 1
    %386 = vsyncpa [#allocation4], 1

</llo_original>
